<compile_context>
chip_gen: v5e
topology: v5e:2x2
jax: 0.10.0
libtpu: 0.0.40
codegen_flags: <defaults>
</compile_context>

<pallas_src>
import functools
import math

import jax
import jax.numpy as jnp
from jax.experimental import pallas as pl
from jax.experimental.pallas import tpu as pltpu

# ResNet-50: (bottleneck width, num blocks, first-block stride) per stage.
_STAGES = ((64, 3, 1), (128, 4, 2), (256, 6, 2), (512, 3, 2))
_EXPANSION = 4

_ACT_DTYPE = jnp.bfloat16          # activations / weights fed to the MXU
_VMEM_LIMIT = 48 * 1024 * 1024     # <= v7x's 64 MiB physical VMEM

_COMPILER_PARAMS = pltpu.CompilerParams(
    dimension_semantics=("parallel", "parallel", "parallel", "arbitrary"),
    vmem_limit_bytes=_VMEM_LIMIT)


def _round_up(v, m):
    return ((v + m - 1) // m) * m


# --------------------------------------------------------------------------
# Pallas kernel: grouped tiled matmul + fused bias / residual / ReLU epilogue
# (BN scale is pre-folded into the weights; only the bias survives here.)
# --------------------------------------------------------------------------
def _matmul_bias_act_kernel(*refs, relu, has_res):
    if has_res:
        x_ref, w_ref, b_ref, r_ref, o_ref, acc_ref = refs
    else:
        x_ref, w_ref, b_ref, o_ref, acc_ref = refs
        r_ref = None
    k = pl.program_id(3)

    @pl.when(k == 0)
    def _init():
        acc_ref[...] = jnp.zeros_like(acc_ref)

    acc_ref[...] += jnp.dot(x_ref[0], w_ref[0],
                            preferred_element_type=jnp.float32)

    @pl.when(k == pl.num_programs(3) - 1)
    def _finalize():
        y = acc_ref[...] + b_ref[0]
        if has_res:
            y = y + r_ref[0].astype(jnp.float32)
        if relu:
            y = jnp.maximum(y, 0.0)
        o_ref[0] = y.astype(o_ref.dtype)


def _grouped_matmul_bias_act(xmat, wmat, bias, residual, relu):
    """xmat: (Gx, M, K) where Gx == G, or 1 when the input is shared by both
    trunks (stem conv).  wmat: (G, K, N), bias: (G, N),
    residual: (G, M, N) or None.  Returns (G, M, N) in _ACT_DTYPE."""
    xg, m, kdim = xmat.shape
    g, _, n = wmat.shape

    # MXU / lane-aligned tile selection (big tiles -> fewer x / w re-reads).
    if m >= 2048 or (m >= 512 and m % 512 == 0):
        tm = 512
    elif m >= 256:
        tm = 256
    else:
        tm = _round_up(m, 8)
    mp = _round_up(m, tm)
    tn = next((t for t in (512, 256, 128) if n % t == 0), n)
    if kdim < 128:
        kp = tk = kdim
    else:
        kp = _round_up(kdim, 128)                 # conv1: 147 -> 256
        tk = next(t for t in (512, 256, 128) if kp % t == 0)

    xmat = jnp.pad(xmat, ((0, 0), (0, mp - m), (0, kp - kdim)))
    xmat = xmat.astype(_ACT_DTYPE)
    wmat = jnp.pad(wmat, ((0, 0), (0, kp - kdim), (0, 0))).astype(_ACT_DTYPE)
    bias2 = bias.reshape(g, 1, n).astype(jnp.float32)

    if xg == g:
        x_index = lambda gi, i, j, k: (gi, i, k)
    else:                                          # shared stem input
        x_index = lambda gi, i, j, k: (0, i, k)

    grid = (g, mp // tm, n // tn, kp // tk)
    in_specs = [
        pl.BlockSpec((1, tm, tk), x_index),
        pl.BlockSpec((1, tk, tn), lambda gi, i, j, k: (gi, k, j)),
        pl.BlockSpec((1, 1, tn), lambda gi, i, j, k: (gi, 0, j)),
    ]
    args = [xmat, wmat, bias2]
    has_res = residual is not None
    if has_res:
        res = jnp.pad(residual, ((0, 0), (0, mp - m), (0, 0)))
        args.append(res.astype(_ACT_DTYPE))
        in_specs.append(pl.BlockSpec((1, tm, tn), lambda gi, i, j, k: (gi, i, j)))

    out = pl.pallas_call(
        functools.partial(_matmul_bias_act_kernel, relu=relu, has_res=has_res),
        out_shape=jax.ShapeDtypeStruct((g, mp, n), _ACT_DTYPE),
        grid=grid,
        in_specs=in_specs,
        out_specs=pl.BlockSpec((1, tm, tn), lambda gi, i, j, k: (gi, i, j)),
        scratch_shapes=[pltpu.VMEM((tm, tn), jnp.float32)],
        compiler_params=_COMPILER_PARAMS,
    )(*args)
    return out[:, :m, :]


# --------------------------------------------------------------------------
# Conv / pool / block / trunk (glue around the Pallas kernel)
# --------------------------------------------------------------------------
def _conv2d_bias_act(x, conv, *, stride, padding, relu, residual=None):
    # x: (Gx, B, H, W, Cin) ; conv['w']: (G, Kh, Kw, Cin, Cout)  (scale-folded)
    w, bias = conv['w'], conv['b']
    gx, b, h, wdt, cin = x.shape
    g, kh, kw, _, cout = w.shape
    ho = (h + 2 * padding - kh) // stride + 1
    wo = (wdt + 2 * padding - kw) // stride + 1
    xp = x if padding == 0 else jnp.pad(
        x, ((0, 0), (0, 0), (padding, padding), (padding, padding), (0, 0)))
    patches = []
    for ih in range(kh):
        for iw in range(kw):
            patches.append(xp[:, :, ih:ih + stride * ho:stride,
                              iw:iw + stride * wo:stride, :])
    xcol = patches[0] if len(patches) == 1 else jnp.concatenate(patches, -1)
    xmat = xcol.reshape(gx, b * ho * wo, kh * kw * cin)
    wmat = w.reshape(g, kh * kw * cin, cout)
    rmat = None if residual is None else residual.reshape(g, b * ho * wo, cout)
    y = _grouped_matmul_bias_act(xmat, wmat, bias, rmat, relu)
    return y.reshape(g, b, ho, wo, cout)


def _maxpool_3x3_s2_p1(x):
    # Running max over the 9 shifted strided windows (fused by XLA; avoids the
    # 9x stacked copy of the feature map in HBM).
    g, b, h, w, c = x.shape
    k, s, pad = 3, 2, 1
    ho = (h + 2 * pad - k) // s + 1
    wo = (w + 2 * pad - k) // s + 1
    xp = jnp.pad(x, ((0, 0), (0, 0), (pad, pad), (pad, pad), (0, 0)),
                 constant_values=-jnp.inf)
    out = None
    for ih in range(k):
        for iw in range(k):
            win = xp[:, :, ih:ih + s * ho:s, iw:iw + s * wo:s, :]
            out = win if out is None else jnp.maximum(out, win)
    return out


def _bottleneck(x, blk, stride):
    if 'cd' in blk:
        identity = _conv2d_bias_act(x, blk['cd'], stride=stride, padding=0,
                                    relu=False)
    else:
        identity = x
    out = _conv2d_bias_act(x, blk['c1'], stride=1, padding=0, relu=True)
    out = _conv2d_bias_act(out, blk['c2'], stride=stride, padding=1, relu=True)
    # Residual add + ReLU fused into the third conv's epilogue.
    out = _conv2d_bias_act(out, blk['c3'], stride=1, padding=0, relu=True,
                           residual=identity)
    return out


def _resnet50_trunk(x, params):
    # children()[:-2] == conv1, bn1, relu, maxpool, layer1..layer4
    x = _conv2d_bias_act(x, params['conv1'], stride=2, padding=3, relu=True)
    x = _maxpool_3x3_s2_p1(x)
    for stage_idx, (_, nblocks, stage_stride) in enumerate(_STAGES):
        for bi in range(nblocks):
            stride = stage_stride if bi == 0 else 1
            x = _bottleneck(x, params['blocks'][stage_idx][bi], stride)
    return x


# --------------------------------------------------------------------------
# Parameter preparation: fold BN scale into the conv weights, stack trunks
# --------------------------------------------------------------------------
def _fold_conv(w, scale, bias):
    return {'w': (w * scale[None, None, None, :]).astype(_ACT_DTYPE),
            'b': bias.astype(jnp.float32)}


def _fold_params(p):
    out = {'conv1': _fold_conv(p['conv1_w'], p['conv1_s'], p['conv1_b'])}
    blocks = []
    for stage in p['blocks']:
        st = []
        for blk in stage:
            fb = {}
            for name in ('1', '2', '3'):
                fb['c' + name] = _fold_conv(blk['w' + name], blk['s' + name],
                                            blk['b' + name])
            if 'wd' in blk:
                fb['cd'] = _fold_conv(blk['wd'], blk['sd'], blk['bd'])
            st.append(fb)
        blocks.append(st)
    out['blocks'] = blocks
    return out


def prepare_params(imagenet_params, aesthetic_params):
    # Fold BN scale into the conv weights, then stack the two trunks along a
    # leading "group" axis so each conv layer is a single pallas_call.
    a = _fold_params(imagenet_params)
    b = _fold_params(aesthetic_params)
    return jax.tree_util.tree_map(lambda u, v: jnp.stack([u, v]), a, b)


def aesthetic_encoder_forward(x_nchw, stacked_params):
    x = jnp.transpose(x_nchw, (0, 2, 3, 1)).astype(_ACT_DTYPE)   # NCHW -> NHWC
    x = x[None]                                  # shared stem input (Gx = 1)
    feat = _resnet50_trunk(x, stacked_params)    # (2, B, h, w, 2048)
    g, b, h, w, c = feat.shape
    # PyTorch: permute(0,2,3,1).view(N, -1, C); we are already NHWC.
    feat = feat.reshape(g, b, h * w, c).astype(jnp.float32)
    return feat[0], feat[1]                      # factual, aesthetic


# --------------------------------------------------------------------------
# Deterministic synthetic parameter initialization
# --------------------------------------------------------------------------
def _init_bn_fold(key, c):
    k1, k2, k3, k4 = jax.random.split(key, 4)
    gamma = jax.random.uniform(k1, (c,), minval=0.5, maxval=1.5,
                               dtype=jnp.float32)
    beta = 0.1 * jax.random.normal(k2, (c,), dtype=jnp.float32)
    mean = 0.1 * jax.random.normal(k3, (c,), dtype=jnp.float32)
    var = jax.random.uniform(k4, (c,), minval=0.5, maxval=1.5,
                             dtype=jnp.float32)
    scale = gamma * jax.lax.rsqrt(var + 1e-5)
    bias = beta - mean * scale
    return scale, bias


def _init_conv(key, kh, kw, cin, cout):
    std = 0.5 / math.sqrt(kh * kw * cin)
    return std * jax.random.normal(key, (kh, kw, cin, cout), dtype=jnp.float32)


def init_resnet50_params(key):
    keys = iter(jax.random.split(key, 256))
    p = {}
    p['conv1_w'] = _init_conv(next(keys), 7, 7, 3, 64)
    p['conv1_s'], p['conv1_b'] = _init_bn_fold(next(keys), 64)
    blocks = []
    in_c = 64
    for (width, nblocks, stage_stride) in _STAGES:
        stage = []
        out_c = width * _EXPANSION
        for bi in range(nblocks):
            stride = stage_stride if bi == 0 else 1
            blk = {}
            blk['w1'] = _init_conv(next(keys), 1, 1, in_c, width)
            blk['s1'], blk['b1'] = _init_bn_fold(next(keys), width)
            blk['w2'] = _init_conv(next(keys), 3, 3, width, width)
            blk['s2'], blk['b2'] = _init_bn_fold(next(keys), width)
            blk['w3'] = _init_conv(next(keys), 1, 1, width, out_c)
            blk['s3'], blk['b3'] = _init_bn_fold(next(keys), out_c)
            if stride != 1 or in_c != out_c:
                blk['wd'] = _init_conv(next(keys), 1, 1, in_c, out_c)
                blk['sd'], blk['bd'] = _init_bn_fold(next(keys), out_c)
            stage.append(blk)
            in_c = out_c
        blocks.append(stage)
    p['blocks'] = blocks
    return p


# --------------------------------------------------------------------------
if __name__ == "__main__":
    key = jax.random.PRNGKey(0)
    kx, kim, kaes = jax.random.split(key, 3)

    # Smoke-check the fused grouped matmul kernel against a jnp reference.
    xa = jax.random.normal(jax.random.PRNGKey(1), (2, 64, 96), jnp.float32)
    wa = 0.1 * jax.random.normal(jax.random.PRNGKey(2), (2, 96, 128),
                                 jnp.float32)
    ba = jax.random.normal(jax.random.PRNGKey(3), (2, 128), jnp.float32)
    got = _grouped_matmul_bias_act(xa, wa, ba, None, True)
    ref = jnp.maximum(
        jnp.einsum("gmk,gkn->gmn",
                   xa.astype(_ACT_DTYPE).astype(jnp.float32),
                   wa.astype(_ACT_DTYPE).astype(jnp.float32))
        + ba[:, None, :], 0.0)
    assert bool(jnp.allclose(got.astype(jnp.float32), ref,
                             atol=5e-2, rtol=5e-2))

    # Small but structure-consistent input: NCHW, 3 channels, 64x64 spatial.
    x = jax.random.normal(kx, (2, 3, 64, 64), dtype=jnp.float32)

    imagenet_params = init_resnet50_params(kim)    # self.imagenet_model
    aesthetic_params = init_resnet50_params(kaes)  # self.aesthetic_model
    stacked = prepare_params(imagenet_params, aesthetic_params)

    fwd = jax.jit(aesthetic_encoder_forward)
    factual, aesthetic = fwd(x, stacked)
    jax.block_until_ready((factual, aesthetic))

    # 64x64 input -> ResNet-50 trunk -> 2x2x2048 -> (N, 4, 2048)
    assert factual.shape == (2, 4, 2048), factual.shape
    assert aesthetic.shape == (2, 4, 2048), aesthetic.shape
    assert bool(jnp.all(jnp.isfinite(factual)))
    assert bool(jnp.all(jnp.isfinite(aesthetic)))

    print("KERNEL_OK")
</pallas_src>

<mosaic_0001>
module attributes {stable_mosaic.version = 11 : i64} {
  func.func @_matmul_bias_act_kernel(%arg0: i32, %arg1: i32, %arg2: i32, %arg3: i32, %arg4: memref<1x64x96xbf16, #tpu.memory_space<vmem>>, %arg5: memref<1x96x128xbf16, #tpu.memory_space<vmem>>, %arg6: memref<1x1x128xf32, #tpu.memory_space<vmem>>, %arg7: memref<1x64x128xbf16, #tpu.memory_space<vmem>>, %arg8: memref<64x128xf32, #tpu.memory_space<vmem>>) attributes {dimension_semantics = [#tpu.dimension_semantics<parallel>, #tpu.dimension_semantics<parallel>, #tpu.dimension_semantics<parallel>, #tpu.dimension_semantics<arbitrary>], iteration_bounds = array<i64: 2, 1, 1, 1>, scalar_prefetch = 0 : i64, scratch_operands = 1 : i64, tpu.core_type = #tpu.core_type<tc>, window_params = [{transform_indices = @transform_0, window_bounds = array<i64: 1, 64, 96>}, {transform_indices = @transform_1, window_bounds = array<i64: 1, 96, 128>}, {transform_indices = @transform_2, window_bounds = array<i64: 1, 1, 128>}, {transform_indices = @transform_3, window_bounds = array<i64: 1, 64, 128>}]} {
    %c0_i32 = arith.constant 0 : i32
    %0 = arith.cmpi eq, %arg3, %c0_i32 : i32
    %1 = arith.extui %0 : i1 to i32
    %c0_i32_0 = arith.constant 0 : i32
    %2 = arith.cmpi ne, %1, %c0_i32_0 : i32
    scf.if %2 {
      %cst_12 = arith.constant 0.000000e+00 : f32
      %14 = vector.broadcast %cst_12 : f32 to vector<64x128xf32>
      %c0_13 = arith.constant 0 : index
      %c0_14 = arith.constant 0 : index
      %15 = vector.load %arg8[%c0_13, %c0_14] : memref<64x128xf32, #tpu.memory_space<vmem>>, vector<64x128xf32>
      tpu.vector_store %arg8[%c0_13, %c0_14], %14 {strides = array<i32>} : memref<64x128xf32, #tpu.memory_space<vmem>>, vector<64x128xf32>,
    } else {
    }
    %c0 = arith.constant 0 : index
    %c0_1 = arith.constant 0 : index
    %3 = vector.load %arg8[%c0, %c0_1] : memref<64x128xf32, #tpu.memory_space<vmem>>, vector<64x128xf32>
    %c0_2 = arith.constant 0 : index
    %c0_3 = arith.constant 0 : index
    %c0_4 = arith.constant 0 : index
    %4 = vector.load %arg4[%c0_2, %c0_3, %c0_4] : memref<1x64x96xbf16, #tpu.memory_space<vmem>>, vector<1x64x96xbf16>
    %5 = vector.shape_cast %4 : vector<1x64x96xbf16> to vector<64x96xbf16>
    %c0_5 = arith.constant 0 : index
    %c0_6 = arith.constant 0 : index
    %c0_7 = arith.constant 0 : index
    %6 = vector.load %arg5[%c0_5, %c0_6, %c0_7] : memref<1x96x128xbf16, #tpu.memory_space<vmem>>, vector<1x96x128xbf16>
    %7 = vector.shape_cast %6 : vector<1x96x128xbf16> to vector<96x128xbf16>
    %cst = arith.constant dense<0.000000e+00> : vector<64x128xf32>
    %8 = tpu.matmul %5, %7, %cst {dimension_numbers = #tpu.dot_dimension_numbers<[1], [0], [0], [1], [0, 0, 1, 1], [], []>} : vector<64x96xbf16>, vector<96x128xbf16>, vector<64x128xf32> -> vector<64x128xf32>
    %9 = arith.addf %3, %8 : vector<64x128xf32>
    %c0_8 = arith.constant 0 : index
    %c0_9 = arith.constant 0 : index
    %10 = vector.load %arg8[%c0_8, %c0_9] : memref<64x128xf32, #tpu.memory_space<vmem>>, vector<64x128xf32>
    tpu.vector_store %arg8[%c0_8, %c0_9], %9 {strides = array<i32>} : memref<64x128xf32, #tpu.memory_space<vmem>>, vector<64x128xf32>,
    %c0_i32_10 = arith.constant 0 : i32
    %11 = arith.cmpi eq, %arg3, %c0_i32_10 : i32
    %12 = arith.extui %11 : i1 to i32
    %c0_i32_11 = arith.constant 0 : i32
    %13 = arith.cmpi ne, %12, %c0_i32_11 : i32
    scf.if %13 {
      %c0_12 = arith.constant 0 : index
      %c0_13 = arith.constant 0 : index
      %14 = vector.load %arg8[%c0_12, %c0_13] : memref<64x128xf32, #tpu.memory_space<vmem>>, vector<64x128xf32>
      %c0_14 = arith.constant 0 : index
      %c0_15 = arith.constant 0 : index
      %c0_16 = arith.constant 0 : index
      %15 = vector.load %arg6[%c0_14, %c0_15, %c0_16] : memref<1x1x128xf32, #tpu.memory_space<vmem>>, vector<1x1x128xf32>
      %16 = vector.shape_cast %15 : vector<1x1x128xf32> to vector<1x128xf32>
      %17 = vector.broadcast %16 : vector<1x128xf32> to vector<64x128xf32>
      %18 = arith.addf %14, %17 : vector<64x128xf32>
      %cst_17 = arith.constant 0.000000e+00 : f32
      %19 = vector.broadcast %cst_17 : f32 to vector<64x128xf32>
      %20 = arith.maximumf %18, %19 : vector<64x128xf32>
      %21 = arith.truncf %20 : vector<64x128xf32> to vector<64x128xbf16>
      %c0_18 = arith.constant 0 : index
      %c0_19 = arith.constant 0 : index
      %c0_20 = arith.constant 0 : index
      %22 = vector.load %arg7[%c0_18, %c0_19, %c0_20] : memref<1x64x128xbf16, #tpu.memory_space<vmem>>, vector<1x64x128xbf16>
      %23 = vector.shape_cast %22 : vector<1x64x128xbf16> to vector<64x128xbf16>
      %24 = vector.shape_cast %21 : vector<64x128xbf16> to vector<1x64x128xbf16>
      tpu.vector_store %arg7[%c0_18, %c0_19, %c0_20], %24 {strides = array<i32>} : memref<1x64x128xbf16, #tpu.memory_space<vmem>>, vector<1x64x128xbf16>,
    } else {
    }
    return
  }
  func.func @transform_0(%arg0: i32, %arg1: i32, %arg2: i32, %arg3: i32) -> (i32, i32, i32) {
    %c0_i32 = arith.constant 0 : i32
    return %arg0, %arg1, %arg3 : i32, i32, i32
  }
  func.func @transform_1(%arg0: i32, %arg1: i32, %arg2: i32, %arg3: i32) -> (i32, i32, i32) {
    %c0_i32 = arith.constant 0 : i32
    return %arg0, %arg3, %arg2 : i32, i32, i32
  }
  func.func @transform_2(%arg0: i32, %arg1: i32, %arg2: i32, %arg3: i32) -> (i32, i32, i32) {
    %c0_i32 = arith.constant 0 : i32
    %c0_i32_0 = arith.constant 0 : i32
    return %arg0, %c0_i32, %arg2 : i32, i32, i32
  }
  func.func @transform_3(%arg0: i32, %arg1: i32, %arg2: i32, %arg3: i32) -> (i32, i32, i32) {
    %c0_i32 = arith.constant 0 : i32
    return %arg0, %arg1, %arg2 : i32, i32, i32
  }
}

</mosaic_0001>

<llo_original>
// kernel: tpu_custom_call.1
$region0: #{tpu_custom_call.1}
  #allocation0 [shape = 'u32[]', space=smem, size = 0x4, offset = 0x4, fixed_abs, tag = 'smem constant byte address 0x4 - core index']
  #allocation1 [shape = 'u32[72,128]{1,0:T(1,128)}', space=vmem, size = 0x9000, scoped, tag = 'internal scratch']
  #allocation2 [shape = 'f32[64,128]{1,0:T(8,128)}', space=vmem, size = 0x8000, scoped, tag = 'scratch operand']
  %s0 = inlined_call_operand.hbm [shape: bf16[2,64,96], index: 0, kind: input, shape index: {}]
  %s1 = inlined_call_operand.hbm [shape: bf16[2,96,128], index: 1, kind: input, shape index: {}]
  %s2 = inlined_call_operand.hbm [shape: f32[2,1,128], index: 2, kind: input, shape index: {}]
  %s3 = inlined_call_operand.hbm [shape: bf16[2,64,128], index: 3, kind: output, shape index: {}]
  %s4 = sld [smem:[#allocation0]]
  $region65: #{tpu_custom_call.1} parent=0
    _
  %s6 = ssub.s32 1, %s4
  %s7 = scalar_select 0, %s6, %s4
  $region1: #{tpu_custom_call.1} parent=0
    #allocation3 [shape = 'u8[32768]{0}', space=vmem, size = 0x8000, scoped, tag = 'input window, operand 0']
    #allocation4 [shape = 's32[2]{0}', space=sflag, size = 0x8, scoped, tag = 'scoped memory for tpu_custom_call.1']
    #allocation5 [shape = 's32[2]{0}', space=sflag, size = 0x8, scoped, tag = 'scoped memory for tpu_custom_call.1']
    #allocation6 [shape = 'u8[49152]{0}', space=vmem, size = 0xc000, scoped, tag = 'input window, operand 1']
    #allocation7 [shape = 's32[2]{0}', space=sflag, size = 0x8, scoped, tag = 'scoped memory for tpu_custom_call.1']
    #allocation8 [shape = 'u8[1024]{0}', space=vmem, size = 0x400, scoped, tag = 'input window, operand 2']
    #allocation9 [shape = 'u8[32768]{0}', space=vmem, size = 0x8000, scoped, tag = 'output window, operand 0']
    %8 = vsyncpa [#allocation4], 0
    %s9 = scalar_lea.sflag [#allocation4], 1
    %10 = vsyncpa %s9, 0
    %11 = vsyncpa [#allocation7], 0
    %s12 = scalar_lea.sflag [#allocation7], 1
    %13 = vsyncpa %s12, 0
    %14 = vsyncpa [#allocation5], 0
    %s15 = scalar_lea.sflag [#allocation5], 1
    %16 = vsyncpa %s15, 0
    loop: start=0, step=1, limit=4
    $region2: #{tpu_custom_call.1} parent=1 // loop_pre_header
      _
    $region3: #{tpu_custom_call.1} parent=1 // loop_header
      %s18 = sphi 0, %s22
      %p19 = scmp.ge.s32.totalorder %s18, 4
      %s25 = sphi 0, %s51
      %s26 = sphi 0, %s47
      %s27 = sphi 0, %s43
      %s28 = sphi 0, %s39
      %s29 = sphi 0, %s25
      %s30 = sphi 0, %s26
      %s31 = sphi 0, %s27
      %s32 = sphi 0, %s28
      %s33 = sphi 0, %s29
      %s34 = sphi 0, %s30
      %s35 = sphi 0, %s31
      %s36 = sphi 0, %s32
      %s58 = sphi 0, %s60
      %s61 = sphi 0, %s58
      %s62 = sphi 0, %s61
      %s78 = sphi 0, %s62
      %s88 = sphi 0, %s90
      %s91 = sphi 0, %s88
      %s92 = sphi 0, %s91
      %s108 = sphi 0, %s92
      %s116 = sphi 0, %s118
      %s119 = sphi 0, %s116
      %s120 = sphi 0, %s119
      %s136 = sphi 0, %s120
      %s146 = sphi 0, %s148
      %s149 = sphi 0, %s146
      %s150 = sphi 0, %s149
      %s166 = sphi 0, %s150
    $region4: #{tpu_custom_call.1} parent=1 // loop_header_branch
      %21 = sbr.rel (%p19) target = $region8
    $region5: #{tpu_custom_call.1} parent=1 // loop_body
      %s23 = ssub.s32 %s18, 1
      %s24 = ssub.s32 %s18, 2
      %s37 = sadd.s32 1, %s28
      %p38 = scmp.ge.s32.totalorder %s37, 1
      %s39 = scalar_select %p38, 0, %s37
      %s40 = sadd.s32 1, %s27
      %s41 = scalar_select %p38, %s40, %s27
      %p42 = scmp.ge.s32.totalorder %s41, 1
      %s43 = scalar_select %p42, 0, %s41
      %s44 = sadd.s32 1, %s26
      %s45 = scalar_select %p42, %s44, %s26
      %p46 = scmp.ge.s32.totalorder %s45, 1
      %s47 = scalar_select %p46, 0, %s45
      %s48 = sadd.s32 1, %s25
      %s49 = scalar_select %p46, %s48, %s25
      %p50 = scmp.ge.s32.totalorder %s49, 2
      %s51 = scalar_select %p50, 0, %s49
      %s52 = ssub.s32 %s25, %s51
      %s53 = ssub.s32 %s26, %s47
      %s54 = sor.u32 %s52, %s53
      %s55 = ssub.s32 %s28, %s39
      %s56 = sor.u32 %s54, %s55
      %p57 = scmp.eq.s32.totalorder %s56, 0
      %s59 = sadd.s32 %s58, 1
      %s60 = scalar_select %p57, %s58, %s59
      %p63 = pneg %p57
      %p64 = scmp.eq.s32.totalorder %s18, 1
      %p65 = por %p63, %p64
      %p66 = scmp.ne.s32.totalorder %s58, %s61
      %p67 = scmp.eq.s32.totalorder %s18, 0
      %p68 = por %p66, %p67
      %p69 = scmp.ne.s32.totalorder %s58, %s61
      %p70 = scmp.eq.s32.totalorder %s23, 1
      %p71 = por %p69, %p70
      %p72 = scmp.ne.s32.totalorder %s61, %s62
      %p73 = scmp.eq.s32.totalorder %s23, 0
      %p74 = por %p72, %p73
      %p75 = scmp.ne.s32.totalorder %s61, %s62
      %p76 = scmp.eq.s32.totalorder %s24, 1
      %p77 = por %p75, %p76
      %p79 = scmp.ne.s32.totalorder %s62, %s78
      %p80 = scmp.eq.s32.totalorder %s24, 0
      %p81 = por %p79, %p80
      %s82 = ssub.s32 %s25, %s51
      %s83 = ssub.s32 %s28, %s39
      %s84 = sor.u32 %s82, %s83
      %s85 = ssub.s32 %s27, %s43
      %s86 = sor.u32 %s84, %s85
      %p87 = scmp.eq.s32.totalorder %s86, 0
      %s89 = sadd.s32 %s88, 1
      %s90 = scalar_select %p87, %s88, %s89
      %p93 = pneg %p87
      %p94 = scmp.eq.s32.totalorder %s18, 1
      %p95 = por %p93, %p94
      %p96 = scmp.ne.s32.totalorder %s88, %s91
      %p97 = scmp.eq.s32.totalorder %s18, 0
      %p98 = por %p96, %p97
      %p99 = scmp.ne.s32.totalorder %s88, %s91
      %p100 = scmp.eq.s32.totalorder %s23, 1
      %p101 = por %p99, %p100
      %p102 = scmp.ne.s32.totalorder %s91, %s92
      %p103 = scmp.eq.s32.totalorder %s23, 0
      %p104 = por %p102, %p103
      %p105 = scmp.ne.s32.totalorder %s91, %s92
      %p106 = scmp.eq.s32.totalorder %s24, 1
      %p107 = por %p105, %p106
      %p109 = scmp.ne.s32.totalorder %s92, %s108
      %p110 = scmp.eq.s32.totalorder %s24, 0
      %p111 = por %p109, %p110
      %s112 = ssub.s32 %s25, %s51
      %s113 = ssub.s32 %s27, %s43
      %s114 = sor.u32 %s112, %s113
      %p115 = scmp.eq.s32.totalorder %s114, 0
      %s117 = sadd.s32 %s116, 1
      %s118 = scalar_select %p115, %s116, %s117
      %p121 = pneg %p115
      %p122 = scmp.eq.s32.totalorder %s18, 1
      %p123 = por %p121, %p122
      %p124 = scmp.ne.s32.totalorder %s116, %s119
      %p125 = scmp.eq.s32.totalorder %s18, 0
      %p126 = por %p124, %p125
      %p127 = scmp.ne.s32.totalorder %s116, %s119
      %p128 = scmp.eq.s32.totalorder %s23, 1
      %p129 = por %p127, %p128
      %p130 = scmp.ne.s32.totalorder %s119, %s120
      %p131 = scmp.eq.s32.totalorder %s23, 0
      %p132 = por %p130, %p131
      %p133 = scmp.ne.s32.totalorder %s119, %s120
      %p134 = scmp.eq.s32.totalorder %s24, 1
      %p135 = por %p133, %p134
      %p137 = scmp.ne.s32.totalorder %s120, %s136
      %p138 = scmp.eq.s32.totalorder %s24, 0
      %p139 = por %p137, %p138
      %s140 = ssub.s32 %s25, %s51
      %s141 = ssub.s32 %s26, %s47
      %s142 = sor.u32 %s140, %s141
      %s143 = ssub.s32 %s27, %s43
      %s144 = sor.u32 %s142, %s143
      %p145 = scmp.eq.s32.totalorder %s144, 0
      %s147 = sadd.s32 %s146, 1
      %s148 = scalar_select %p145, %s146, %s147
      %p151 = pneg %p145
      %p152 = scmp.eq.s32.totalorder %s18, 1
      %p153 = por %p151, %p152
      %p154 = scmp.ne.s32.totalorder %s146, %s149
      %p155 = scmp.eq.s32.totalorder %s18, 0
      %p156 = por %p154, %p155
      %p157 = scmp.ne.s32.totalorder %s146, %s149
      %p158 = scmp.eq.s32.totalorder %s23, 1
      %p159 = por %p157, %p158
      %p160 = scmp.ne.s32.totalorder %s149, %s150
      %p161 = scmp.eq.s32.totalorder %s23, 0
      %p162 = por %p160, %p161
      %p163 = scmp.ne.s32.totalorder %s149, %s150
      %p164 = scmp.eq.s32.totalorder %s24, 1
      %p165 = por %p163, %p164
      %p167 = scmp.ne.s32.totalorder %s150, %s166
      %p168 = scmp.eq.s32.totalorder %s24, 0
      %p169 = por %p167, %p168
      %p170 = scmp.le.s32.totalorder 1, %s18
      %p171 = scmp.lt.s32.totalorder %s18, 3
      %p172 = pnand %p170, %p171
      %p173 = pneg %p172
      // Predicated region
      $region9: #{tpu_custom_call.1} parent=5 // pred_check
        _
      $region10: #{tpu_custom_call.1} parent=5 // pred_check_branch
        %175 = sbr.rel (%p172) target = $region12
      $region11: #{tpu_custom_call.1} parent=5 // pred_region
        %s176 = ssub.s32 %s18, 1
      $region12: #{tpu_custom_call.1} parent=5 // pred_fallthru
        _
      %p177 = scmp.lt.s32.totalorder %s18, 2
      // Predicated region
      $region13: #{tpu_custom_call.1} parent=5 // pred_check
        %p178 = pneg %p177
      $region14: #{tpu_custom_call.1} parent=5 // pred_check_branch
        %180 = sbr.rel (%p178) target = $region16
      $region15: #{tpu_custom_call.1} parent=5 // pred_region
        // Predicated region
        $region17: #{tpu_custom_call.1} parent=15 // pred_check
          %p181 = pneg %p68
        $region18: #{tpu_custom_call.1} parent=15 // pred_check_branch
          %183 = sbr.rel (%p181) target = $region20
        $region19: #{tpu_custom_call.1} parent=15 // pred_region
          %s184 = sand.u32 %s58, 1
          %s185 = scalar_lea.sflag [#allocation4], %s184
          %s186 = sand.u32 %s58, 1
          %s187 = smul.addr %s186, 32
          %s188 = scalar_lea.vmem [#allocation3], %s187
          %s189 = smul.u32 8, %s26
          %191 = vsyncadd %s185, 0
          %s192 = sadd.s32 %s28, %s189
          %s193 = smul.addr %s25, 8
          %s194 = sadd.s32 %s192, %s193
          %s195 = smul.addr %s194, 4
          %s196 = scalar_lea.hbm %s0, %s195
          %s197 = sshll.u32 %s196, 4
          %s198 = int_to_ptr.hbm [resolvable:$true] %s197
          %s199 = sshll.u32 %s188, 4
          %s200 = int_to_ptr.vmem [resolvable:$true] %s199
          %205 = dma.hbm_to_vmem [thread:$0]  %s198, 512, %s200, %s185, 64, 64, 4
        $region20: #{tpu_custom_call.1} parent=15 // pred_fallthru
          _
        // Predicated region
        $region21: #{tpu_custom_call.1} parent=15 // pred_check
          %p206 = pneg %p98
        $region22: #{tpu_custom_call.1} parent=15 // pred_check_branch
          %208 = sbr.rel (%p206) target = $region24
        $region23: #{tpu_custom_call.1} parent=15 // pred_region
          %s209 = sand.u32 %s18, 1
          %s210 = scalar_lea.sflag [#allocation7], %s209
          %s211 = sand.u32 %s88, 1
          %s212 = smul.addr %s211, 48
          %s213 = scalar_lea.vmem [#allocation6], %s212
          %s214 = smul.u32 12, %s28
          %216 = vsyncadd %s210, 0
          %s217 = sadd.s32 %s27, %s214
          %s218 = smul.addr %s25, 12
          %s219 = sadd.s32 %s217, %s218
          %s220 = smul.addr %s219, 4
          %s221 = scalar_lea.hbm %s1, %s220
          %s222 = sshll.u32 %s221, 4
          %s223 = int_to_ptr.hbm [resolvable:$true] %s222
          %s224 = sshll.u32 %s213, 4
          %s225 = int_to_ptr.vmem [resolvable:$true] %s224
          %230 = dma.hbm_to_vmem [thread:$0]  %s223, 768, %s225, %s210, 64, 64, 4
        $region24: #{tpu_custom_call.1} parent=15 // pred_fallthru
          _
        // Predicated region
        $region25: #{tpu_custom_call.1} parent=15 // pred_check
          %p231 = pneg %p126
        $region26: #{tpu_custom_call.1} parent=15 // pred_check_branch
          %233 = sbr.rel (%p231) target = $region28
        $region27: #{tpu_custom_call.1} parent=15 // pred_region
          %s234 = sand.u32 %s18, 1
          %s235 = scalar_lea.sflag [#allocation7], %s234
          %s236 = sand.u32 %s116, 1
          %s237 = scalar_lea.vmem [#allocation8], %s236
          %239 = vsyncadd %s235, 0
          %s240 = sadd.s32 %s27, %s25
          %s241 = scalar_lea.hbm %s2, %s240
          %s243 = sshll.u32 %s241, 4
          %s244 = int_to_ptr.hbm [resolvable:$true] %s243
          %s245 = sshll.u32 %s237, 4
          %s246 = int_to_ptr.vmem [resolvable:$true] %s245
          %248 = dma.hbm_to_vmem [thread:$0]  %s244, 16, %s246, %s235
        $region28: #{tpu_custom_call.1} parent=15 // pred_fallthru
          _
      $region16: #{tpu_custom_call.1} parent=5 // pred_fallthru
        _
      %p249 = scmp.le.s32.totalorder 1, %s18
      %p250 = scmp.lt.s32.totalorder %s18, 3
      %p251 = pnand %p249, %p250
      %p252 = pneg %p251
      // Predicated region
      $region29: #{tpu_custom_call.1} parent=5 // pred_check
        _
      $region30: #{tpu_custom_call.1} parent=5 // pred_check_branch
        %254 = sbr.rel (%p251) target = $region32
      $region31: #{tpu_custom_call.1} parent=5 // pred_region
        %s255 = ssub.s32 %s18, 1
        %s256 = sand.u32 %s61, 1
        %s257 = scalar_lea.sflag [#allocation4], %s256
        %s258 = sand.u32 %s61, 1
        %s259 = smul.addr %s258, 32
        %s260 = scalar_lea.vmem [#allocation3], %s259
        // Predicated region
        $region33: #{tpu_custom_call.1} parent=31 // pred_check
          %p261 = pneg %p74
        $region34: #{tpu_custom_call.1} parent=31 // pred_check_branch
          %263 = sbr.rel (%p261) target = $region36
        $region35: #{tpu_custom_call.1} parent=31 // pred_region
          %265 = dma.done %s257, 512
        $region36: #{tpu_custom_call.1} parent=31 // pred_fallthru
          _
        %s266 = sand.u32 %s23, 1
        %s267 = scalar_lea.sflag [#allocation7], %s266
        %s268 = sand.u32 %s91, 1
        %s269 = smul.addr %s268, 48
        %s270 = scalar_lea.vmem [#allocation6], %s269
        // Predicated region
        $region37: #{tpu_custom_call.1} parent=31 // pred_check
          %p271 = pneg %p104
        $region38: #{tpu_custom_call.1} parent=31 // pred_check_branch
          %273 = sbr.rel (%p271) target = $region40
        $region39: #{tpu_custom_call.1} parent=31 // pred_region
          %275 = dma.done %s267, 768
        $region40: #{tpu_custom_call.1} parent=31 // pred_fallthru
          _
        %s276 = sand.u32 %s23, 1
        %s277 = scalar_lea.sflag [#allocation7], %s276
        %s278 = sand.u32 %s119, 1
        %s279 = scalar_lea.vmem [#allocation8], %s278
        // Predicated region
        $region41: #{tpu_custom_call.1} parent=31 // pred_check
          %p280 = pneg %p132
        $region42: #{tpu_custom_call.1} parent=31 // pred_check_branch
          %282 = sbr.rel (%p280) target = $region44
        $region43: #{tpu_custom_call.1} parent=31 // pred_region
          %284 = dma.done %s277, 16
        $region44: #{tpu_custom_call.1} parent=31 // pred_fallthru
          _
        %s285 = sand.u32 %s61, 1
        %s286 = scalar_lea.sflag [#allocation4], %s285
        %s287 = sand.u32 %s61, 1
        %s288 = smul.addr %s287, 32
        %s289 = scalar_lea.vmem [#allocation3], %s288
        %p290 = pneg %p74
        %p291 = pneg %p71
        %s292 = sand.u32 %s23, 1
        %s293 = scalar_lea.sflag [#allocation7], %s292
        %s294 = sand.u32 %s91, 1
        %s295 = smul.addr %s294, 48
        %s296 = scalar_lea.vmem [#allocation6], %s295
        %p297 = pneg %p104
        %p298 = pneg %p101
        %s299 = sand.u32 %s23, 1
        %s300 = scalar_lea.sflag [#allocation7], %s299
        %s301 = sand.u32 %s119, 1
        %s302 = scalar_lea.vmem [#allocation8], %s301
        %p303 = pneg %p132
        %p304 = pneg %p129
        %p305 = pneg %p162
        %p306 = pneg %p159
        %s307 = sand.u32 %s149, 1
        %s308 = scalar_lea.sflag [#allocation5], %s307
        %s309 = sand.u32 %s149, 1
        %s310 = smul.addr %s309, 32
        %s311 = scalar_lea.vmem [#allocation9], %s310
        %s312 = smul.u32 8, %s30
        %s313 = smul.u32 12, %s32
        %s314 = smul.u32 8, %s30
        %p316 = scmp.eq.s32.totalorder %s32, 0
        // Predicated region
        $region45: #{tpu_custom_call.1} parent=31 // pred_check
          %p317 = pneg %p316
        $region46: #{tpu_custom_call.1} parent=31 // pred_check_branch
          %319 = sbr.rel (%p317) target = $region48
        $region47: #{tpu_custom_call.1} parent=31 // pred_region
          %320 = vst [vmem:[#allocation2] sm:$0xff] 0.0
          %321 = vst [vmem:[#allocation2 + $0x8] sm:$0xff] 0.0
          %322 = vst [vmem:[#allocation2 + $0x10] sm:$0xff] 0.0
          %323 = vst [vmem:[#allocation2 + $0x18] sm:$0xff] 0.0
          %324 = vst [vmem:[#allocation2 + $0x20] sm:$0xff] 0.0
          %325 = vst [vmem:[#allocation2 + $0x28] sm:$0xff] 0.0
          %326 = vst [vmem:[#allocation2 + $0x30] sm:$0xff] 0.0
          %327 = vst [vmem:[#allocation2 + $0x38] sm:$0xff] 0.0
        $region48: #{tpu_custom_call.1} parent=31 // pred_fallthru
          _
        %v328 = vld [vmem:[#allocation2] sm:$0xff]
        %v329 = vld [vmem:[#allocation2 + $0x8] sm:$0xff]
        %v330 = vld [vmem:[#allocation2 + $0x10] sm:$0xff]
        %v331 = vld [vmem:[#allocation2 + $0x18] sm:$0xff]
        %v332 = vld [vmem:[#allocation2 + $0x20] sm:$0xff]
        %v333 = vld [vmem:[#allocation2 + $0x28] sm:$0xff]
        %v334 = vld [vmem:[#allocation2 + $0x30] sm:$0xff]
        %v335 = vld [vmem:[#allocation2 + $0x38] sm:$0xff]
        %v336 = vld [vmem:[%s260] sm:$0xf]
        %v337 = vld [vmem:[%s260 + $0x4] sm:$0xf]
        %v338 = vld [vmem:[%s260 + $0x8] sm:$0xf]
        %v339 = vld [vmem:[%s260 + $0xc] sm:$0xf]
        %v340 = vld [vmem:[%s260 + $0x10] sm:$0xf]
        %v341 = vld [vmem:[%s260 + $0x14] sm:$0xf]
        %v342 = vld [vmem:[%s260 + $0x18] sm:$0xf]
        %v343 = vld [vmem:[%s260 + $0x1c] sm:$0xf]
        %v344 = vld [vmem:[%s270] sm:$0xf]
        %v345 = vld [vmem:[%s270 + $0x4] sm:$0xf]
        %v346 = vld [vmem:[%s270 + $0x8] sm:$0xf]
        %v347 = vld [vmem:[%s270 + $0xc] sm:$0xf]
        %v348 = vld [vmem:[%s270 + $0x10] sm:$0xf]
        %v349 = vld [vmem:[%s270 + $0x14] sm:$0xf]
        %v350 = vld [vmem:[%s270 + $0x18] sm:$0xf]
        %v351 = vld [vmem:[%s270 + $0x1c] sm:$0xf]
        %v352 = vld [vmem:[%s270 + $0x20] sm:$0xf]
        %v353 = vld [vmem:[%s270 + $0x24] sm:$0xf]
        %v354 = vld [vmem:[%s270 + $0x28] sm:$0xf]
        %v355 = vld [vmem:[%s270 + $0x2c] sm:$0xf]
        %v364 = vunpack.c.l.b16 %v336
        %v365 = vunpack.c.l.b16 %v337
        %v366 = vunpack.c.l.b16 %v338
        %v367 = vunpack.c.l.b16 %v339
        %v368 = vunpack.c.l.b16 %v340
        %v369 = vunpack.c.l.b16 %v341
        %v370 = vunpack.c.l.b16 %v342
        %v371 = vunpack.c.l.b16 %v343
        %v372 = vpack.c.b16 %v365, %v364
        %v373 = vpack.c.b16 %v367, %v366
        %v374 = vpack.c.b16 %v369, %v368
        %v375 = vpack.c.b16 %v371, %v370
        %v388 = vunpack.c.l.b16 %v344
        %v389 = vunpack.c.l.b16 %v345
        %v390 = vunpack.c.l.b16 %v346
        %v391 = vunpack.c.l.b16 %v347
        %v392 = vunpack.c.l.b16 %v348
        %v393 = vunpack.c.l.b16 %v349
        %v394 = vunpack.c.l.b16 %v350
        %v395 = vunpack.c.l.b16 %v351
        %v396 = vunpack.c.l.b16 %v352
        %v397 = vunpack.c.l.b16 %v353
        %v398 = vunpack.c.l.b16 %v354
        %v399 = vunpack.c.l.b16 %v355
        %v400 = vpack.c.b16 %v389, %v388
        %v401 = vpack.c.b16 %v391, %v390
        %v402 = vpack.c.b16 %v393, %v392
        %v403 = vpack.c.b16 %v395, %v394
        %v404 = vpack.c.b16 %v397, %v396
        %v405 = vpack.c.b16 %v399, %v398
        %vm412 = vcmask 785408
        %v414 = vsel %vm412, %v372, 0
        %v417 = vsel %vm412, %v373, 0
        %v420 = vsel %vm412, %v374, 0
        %v423 = vsel %vm412, %v375, 0
        %425 = vmatpush.bf16.msra.mxu0 0
        %426 = vmatpush.bf16.msra.mxu0 0
        %427 = vmatpush.bf16.msra.mxu0 %v405
        %428 = vmatpush.bf16.msra.mxu0 %v404
        %429 = vmatpush.bf16.msra.mxu0 %v403
        %430 = vmatpush.bf16.msra.mxu0 %v402
        %431 = vmatpush.bf16.msra.mxu0 %v401
        %432 = vmatpush.bf16.msra.mxu0 %v400
        %433 = vmatmul.bf16.gmra.mxu0 %v414
        %v434 = vpop.f32.mrf.mxu0
        %v435 = vadd.f32 0.0, %v434
        %v436 = vpop.f32.mrf.mxu0
        %v437 = vadd.f32 0.0, %v436
        %438 = vmatmul.bf16.gmra.mxu0 %v417
        %v439 = vpop.f32.mrf.mxu0
        %v440 = vadd.f32 0.0, %v439
        %v441 = vpop.f32.mrf.mxu0
        %v442 = vadd.f32 0.0, %v441
        %443 = vmatmul.bf16.gmra.mxu0 %v420
        %v444 = vpop.f32.mrf.mxu0
        %v445 = vadd.f32 0.0, %v444
        %v446 = vpop.f32.mrf.mxu0
        %v447 = vadd.f32 0.0, %v446
        %448 = vmatmul.bf16.gmra.mxu0 %v423
        %v449 = vpop.f32.mrf.mxu0
        %v450 = vadd.f32 0.0, %v449
        %v451 = vpop.f32.mrf.mxu0
        %v452 = vadd.f32 0.0, %v451
        %453 = vdwg.mxu0
        %v454 = vadd.f32 %v328, %v435
        %v455 = vadd.f32 %v329, %v437
        %v456 = vadd.f32 %v330, %v440
        %v457 = vadd.f32 %v331, %v442
        %v458 = vadd.f32 %v332, %v445
        %v459 = vadd.f32 %v333, %v447
        %v460 = vadd.f32 %v334, %v450
        %v461 = vadd.f32 %v335, %v452
        %462 = vst [vmem:[#allocation2] sm:$0xff] %v454
        %463 = vst [vmem:[#allocation2 + $0x8] sm:$0xff] %v455
        %464 = vst [vmem:[#allocation2 + $0x10] sm:$0xff] %v456
        %465 = vst [vmem:[#allocation2 + $0x18] sm:$0xff] %v457
        %466 = vst [vmem:[#allocation2 + $0x20] sm:$0xff] %v458
        %467 = vst [vmem:[#allocation2 + $0x28] sm:$0xff] %v459
        %468 = vst [vmem:[#allocation2 + $0x30] sm:$0xff] %v460
        %469 = vst [vmem:[#allocation2 + $0x38] sm:$0xff] %v461
        // Predicated region
        $region49: #{tpu_custom_call.1} parent=31 // pred_check
          %p470 = pneg %p316
        $region50: #{tpu_custom_call.1} parent=31 // pred_check_branch
          %472 = sbr.rel (%p470) target = $region52
        $region51: #{tpu_custom_call.1} parent=31 // pred_region
          %v473 = vld [vmem:[#allocation2] sm:$0xff]
          %v474 = vld [vmem:[#allocation2 + $0x8] sm:$0xff]
          %v475 = vld [vmem:[#allocation2 + $0x10] sm:$0xff]
          %v476 = vld [vmem:[#allocation2 + $0x18] sm:$0xff]
          %v477 = vld [vmem:[#allocation2 + $0x20] sm:$0xff]
          %v478 = vld [vmem:[#allocation2 + $0x28] sm:$0xff]
          %v479 = vld [vmem:[#allocation2 + $0x30] sm:$0xff]
          %v480 = vld [vmem:[#allocation2 + $0x38] sm:$0xff]
          %v481 = vld [vmem:[%s279] sm:$0x1]
          %v483 = vperm.slane %v481, 0
          %v485 = vadd.f32 %v473, %v483
          %v486 = vadd.f32 %v474, %v483
          %v487 = vadd.f32 %v475, %v483
          %v488 = vadd.f32 %v476, %v483
          %v489 = vadd.f32 %v477, %v483
          %v490 = vadd.f32 %v478, %v483
          %v491 = vadd.f32 %v479, %v483
          %v492 = vadd.f32 %v480, %v483
          %v493 = vmax.f32 %v485, 0.0
          %v494 = vmax.f32 %v486, 0.0
          %v495 = vmax.f32 %v487, 0.0
          %v496 = vmax.f32 %v488, 0.0
          %v497 = vmax.f32 %v489, 0.0
          %v498 = vmax.f32 %v490, 0.0
          %v499 = vmax.f32 %v491, 0.0
          %v500 = vmax.f32 %v492, 0.0
          %v501 = vpack.c.bf16 %v493, %v493
          %v502 = vpack.c.bf16 %v494, %v494
          %v503 = vpack.c.bf16 %v495, %v495
          %v504 = vpack.c.bf16 %v496, %v496
          %v505 = vpack.c.bf16 %v497, %v497
          %v506 = vpack.c.bf16 %v498, %v498
          %v507 = vpack.c.bf16 %v499, %v499
          %v508 = vpack.c.bf16 %v500, %v500
          %509 = vst [vmem:[%s311] sm:$0xf] %v501
          %510 = vst [vmem:[%s311 + $0x4] sm:$0xf] %v502
          %511 = vst [vmem:[%s311 + $0x8] sm:$0xf] %v503
          %512 = vst [vmem:[%s311 + $0xc] sm:$0xf] %v504
          %513 = vst [vmem:[%s311 + $0x10] sm:$0xf] %v505
          %514 = vst [vmem:[%s311 + $0x14] sm:$0xf] %v506
          %515 = vst [vmem:[%s311 + $0x18] sm:$0xf] %v507
          %516 = vst [vmem:[%s311 + $0x1c] sm:$0xf] %v508
        $region52: #{tpu_custom_call.1} parent=31 // pred_fallthru
          _
        %s517 = sand.u32 %s149, 1
        %s518 = scalar_lea.sflag [#allocation5], %s517
        %s519 = sand.u32 %s149, 1
        %s520 = smul.addr %s519, 32
        %s521 = scalar_lea.vmem [#allocation9], %s520
        // Predicated region
        $region53: #{tpu_custom_call.1} parent=31 // pred_check
          %p522 = pneg %p159
        $region54: #{tpu_custom_call.1} parent=31 // pred_check_branch
          %524 = sbr.rel (%p522) target = $region56
        $region55: #{tpu_custom_call.1} parent=31 // pred_region
          %s525 = smul.u32 8, %s30
          %527 = vsyncadd %s518, 0
          %s528 = sadd.s32 %s31, %s525
          %s529 = smul.addr %s29, 8
          %s530 = sadd.s32 %s528, %s529
          %s531 = smul.addr %s530, 4
          %s532 = scalar_lea.hbm %s3, %s531
          %s533 = sshll.u32 %s521, 4
          %s534 = int_to_ptr.vmem [resolvable:$true] %s533
          %s535 = sshll.u32 %s532, 4
          %s536 = int_to_ptr.hbm [resolvable:$true] %s535
          %541 = dma.vmem_to_hbm [thread:$0]  %s534, 512, %s536, %s518, 64, 64, 4
        $region56: #{tpu_custom_call.1} parent=31 // pred_fallthru
          _
      $region32: #{tpu_custom_call.1} parent=5 // pred_fallthru
        _
      %p542 = scmp.le.s32.totalorder 2, %s18
      // Predicated region
      $region57: #{tpu_custom_call.1} parent=5 // pred_check
        %p543 = pneg %p542
      $region58: #{tpu_custom_call.1} parent=5 // pred_check_branch
        %545 = sbr.rel (%p543) target = $region60
      $region59: #{tpu_custom_call.1} parent=5 // pred_region
        %s546 = ssub.s32 %s18, 2
        // Predicated region
        $region61: #{tpu_custom_call.1} parent=59 // pred_check
          %p547 = pneg %p165
        $region62: #{tpu_custom_call.1} parent=59 // pred_check_branch
          %549 = sbr.rel (%p547) target = $region64
        $region63: #{tpu_custom_call.1} parent=59 // pred_region
          %s550 = sand.u32 %s150, 1
          %s551 = scalar_lea.sflag [#allocation5], %s550
          %s552 = sand.u32 %s150, 1
          %s553 = smul.addr %s552, 32
          %s554 = scalar_lea.vmem [#allocation9], %s553
          %556 = dma.done %s551, 512
        $region64: #{tpu_custom_call.1} parent=59 // pred_fallthru
          _
      $region60: #{tpu_custom_call.1} parent=5 // pred_fallthru
        _
    $region6: #{tpu_custom_call.1} parent=1 // loop_footer
      %s22 = sadd.s32 1, %s18
    $region7: #{tpu_custom_call.1} parent=1 // loop_footer_branch
      %17 = sbr.rel target = $region3
    $region8: #{tpu_custom_call.1} parent=1 // loop_exit
      _
    %557 = vsyncpa [#allocation4], 1
    %s558 = scalar_lea.sflag [#allocation4], 1
    %559 = vsyncpa %s558, 1
    %560 = vsyncpa [#allocation7], 1
    %s561 = scalar_lea.sflag [#allocation7], 1
    %562 = vsyncpa %s561, 1
    %563 = vsyncpa [#allocation5], 1
    %s564 = scalar_lea.sflag [#allocation5], 1
    %565 = vsyncpa %s564, 1

</llo_original>
